<compile_context>
chip_gen: v7x
topology: tpu7x:2x2x1
jax: 0.10.0
libtpu: 0.0.40
codegen_flags: <defaults>
</compile_context>

<pallas_src>
import functools

import jax
import jax.numpy as jnp
from jax import lax
from jax.experimental import pallas as pl
from jax.experimental.pallas import tpu as pltpu

LN_EPS = 1e-5     # torch.nn.LayerNorm default
LANES = 128       # TPU lane width


def _round_up(x, m):
    return ((x + m - 1) // m) * m


# --------------------------------------------------------------------------- #
# Kernel
# --------------------------------------------------------------------------- #
def reward_decoder_kernel(feat_ref, w1_ref, g1_ref, b1_ref,
                          w2_ref, g2_ref, b2_ref,
                          wh_ref, bh_ref, out_ref):
    """One row-tile of the RewardDecoder forward pass, entirely in VMEM."""
    cdt = w1_ref.dtype                       # MXU compute dtype (bf16)
    # feat arrives as f32 (no wrapper-side HBM cast pass); cast in-VMEM.
    x = feat_ref[...].astype(cdt)

    def linear_ln_relu(x, w_ref, g_ref, b_ref):
        # Linear (no bias) on the MXU, f32 accumulation.
        h = jnp.dot(x, w_ref[...], preferred_element_type=jnp.float32)
        # LayerNorm over the feature dim — stats in f32, centered value reused.
        mu = jnp.mean(h, axis=-1, keepdims=True)
        hc = h - mu
        var = jnp.mean(hc * hc, axis=-1, keepdims=True)
        hn = hc * lax.rsqrt(var + LN_EPS) * g_ref[...] + b_ref[...]
        # ReLU, then back to bf16 to feed the next MXU pass.
        return jnp.maximum(hn, 0.0).astype(cdt)

    # TODO(synk): for large H (MXU-bound) split the row tile into 2-4 sub-chunks
    # with an unrolled fori_loop so chunk i's LayerNorm (VPU/XLU/EUP) overlaps
    # chunk i+1's matmul; likewise K-tile the (H,H) weights on v7x when H >~ 3k.
    x = linear_ln_relu(x, w1_ref, g1_ref, b1_ref)
    x = linear_ln_relu(x, w2_ref, g2_ref, b2_ref)

    # Head: Linear with bias, f32 accumulation, lane-dense (padded-C) store.
    out = jnp.dot(x, wh_ref[...], preferred_element_type=jnp.float32) + bh_ref[...]
    out_ref[...] = out.astype(out_ref.dtype)


# --------------------------------------------------------------------------- #
# VMEM budget (per-generation cap)
# --------------------------------------------------------------------------- #
def _vmem_limit_bytes(tile_rows, H, Cp, w_bytes=2):
    # Row tiles are double-buffered (feat f32 in, out f32 out); all weight /
    # vector blocks are single-buffered (pl.Buffered(1)).  Add headroom for
    # Mosaic internal scratch.
    tiles = 2 * tile_rows * H * 4 + 2 * tile_rows * Cp * 4
    weights = (2 * H * H + H * Cp) * w_bytes + (4 * H + Cp) * 4
    est = tiles + weights + (8 << 20)
    try:
        phys = pltpu.get_tpu_info().vmem_capacity_bytes
    except Exception:
        phys = 64 << 20                      # conservative (v7x per-TC)
    # leave >=16 MiB for compiler scratch; never ask for more than ~100 MiB.
    cap = min(100 << 20, phys - (16 << 20))
    return int(min(max(est, 32 << 20), cap))


# --------------------------------------------------------------------------- #
# Parameter preparation (one-time, outside the jitted hot path)
# --------------------------------------------------------------------------- #
def prepare_params(params, compute_dtype=jnp.bfloat16):
    """Cast backbone/head weights to bf16 and lane-pad the head ONCE.

    Returns (prepped_params, num_classes).  Do this outside the per-step call
    so no per-invocation re-cast HBM traffic is paid.
    """
    C = params["wh"].shape[1]
    Cp = _round_up(max(C, LANES), LANES)
    prepped = {
        "w1": params["w1"].astype(compute_dtype),
        "w2": params["w2"].astype(compute_dtype),
        "g1": params["g1"], "b1": params["b1"],
        "g2": params["g2"], "b2": params["b2"],
        "wh": jnp.pad(params["wh"], ((0, 0), (0, Cp - C))).astype(compute_dtype),
        "bh": jnp.pad(params["bh"], ((0, 0), (0, Cp - C))),     # f32
    }
    return jax.tree_util.tree_map(jnp.asarray, prepped), C


# --------------------------------------------------------------------------- #
# Wrapper
# --------------------------------------------------------------------------- #
@functools.partial(jax.jit, static_argnames=("num_classes", "tile_rows"))
def reward_decoder(feat, prepped, *, num_classes, tile_rows=512):
    """feat: [B, T, H] float32 -> reward logits [B, T, num_classes] (f32)."""
    B, T, H = feat.shape
    C = num_classes
    Cp = prepped["wh"].shape[1]
    N = B * T

    # Row tiling: multiple of 8, no divisibility requirement on B*T, and make
    # sure we produce >=2 tiles when possible so both v7x TensorCores are fed.
    tile_rows = max(8, (tile_rows // 8) * 8)
    two_tile_cap = _round_up(max(-(-N // 2), 8), 8)      # ceil(N/2), 8-aligned
    tile_rows = min(tile_rows, two_tile_cap)
    Np = _round_up(N, tile_rows)

    feat2d = feat.reshape(N, H)                          # stays f32
    if Np != N:
        feat2d = jnp.pad(feat2d, ((0, Np - N), (0, 0)))

    grid = (Np // tile_rows,)
    row_spec = pl.BlockSpec((tile_rows, H), lambda i: (i, 0))
    out_spec = pl.BlockSpec((tile_rows, Cp), lambda i: (i, 0))
    # Constant-index blocks: fetched once, single-buffered (no wasted 2nd copy).
    full = lambda shape: pl.BlockSpec(shape, lambda i: (0, 0),
                                      pipeline_mode=pl.Buffered(1))

    out2d = pl.pallas_call(
        reward_decoder_kernel,
        out_shape=jax.ShapeDtypeStruct((Np, Cp), jnp.float32),
        grid_spec=pl.GridSpec(
            grid=grid,
            in_specs=[
                row_spec,          # feat tile (f32, cast in-kernel)
                full((H, H)),      # w1 (bf16)
                full((1, H)),      # ln1 gamma (f32)
                full((1, H)),      # ln1 beta  (f32)
                full((H, H)),      # w2 (bf16)
                full((1, H)),      # ln2 gamma (f32)
                full((1, H)),      # ln2 beta  (f32)
                full((H, Cp)),     # head weight (bf16, lane-padded)
                full((1, Cp)),     # head bias   (f32, lane-padded)
            ],
            out_specs=out_spec,
        ),
        compiler_params=pltpu.CompilerParams(
            dimension_semantics=("parallel",),   # shard row tiles across TCs
            vmem_limit_bytes=_vmem_limit_bytes(tile_rows, H, Cp),
        ),
    )(feat2d, prepped["w1"], prepped["g1"], prepped["b1"],
      prepped["w2"], prepped["g2"], prepped["b2"],
      prepped["wh"], prepped["bh"])

    return out2d[:N, :C].reshape(B, T, C)


# --------------------------------------------------------------------------- #
# Test harness
# --------------------------------------------------------------------------- #
def init_params(key, hidden, num_classes):
    """Deterministic synthetic parameters (shapes match the PyTorch module)."""
    k1, k2, k3, k4 = jax.random.split(key, 4)
    scale = 1.0 / jnp.sqrt(hidden)
    return {
        # backbone Linear(H, H, bias=False) x2, stored as [in, out]
        "w1": jax.random.normal(k1, (hidden, hidden), jnp.float32) * scale,
        "w2": jax.random.normal(k2, (hidden, hidden), jnp.float32) * scale,
        # LayerNorm(H) affine params (perturbed so the affine path is exercised)
        "g1": jnp.ones((1, hidden), jnp.float32) * 1.05,
        "b1": jnp.full((1, hidden), 0.01, jnp.float32),
        "g2": jnp.ones((1, hidden), jnp.float32) * 0.95,
        "b2": jnp.full((1, hidden), -0.02, jnp.float32),
        # head Linear(H, num_classes) with bias
        "wh": jax.random.normal(k3, (hidden, num_classes), jnp.float32) * scale,
        "bh": jax.random.normal(k4, (1, num_classes), jnp.float32) * 0.1,
    }


def reward_decoder_ref(feat, p, compute_dtype=jnp.bfloat16):
    """Pure-JAX reference applying the same bf16 rounding as the kernel."""
    cast = lambda a: a.astype(compute_dtype)

    def block(x, w, g, b):
        h = jnp.dot(cast(x), cast(w), preferred_element_type=jnp.float32)
        mu = jnp.mean(h, axis=-1, keepdims=True)
        hc = h - mu
        var = jnp.mean(hc * hc, axis=-1, keepdims=True)
        hn = hc / jnp.sqrt(var + LN_EPS) * g + b
        return jnp.maximum(hn, 0.0)

    x = block(feat, p["w1"], p["g1"], p["b1"])
    x = block(x, p["w2"], p["g2"], p["b2"])
    return jnp.dot(cast(x), cast(p["wh"]), preferred_element_type=jnp.float32) + p["bh"]


if __name__ == "__main__":
    B, T, H, C = 2, 8, 32, 16  # batch, seq, transformer_hidden_dim, num_classes
    key = jax.random.PRNGKey(0)
    k_feat, k_params = jax.random.split(key)

    feat = jax.random.normal(k_feat, (B, T, H), jnp.float32)
    params = init_params(k_params, H, C)

    # One-time weight cast/pad outside the jitted hot path.
    prepped, num_classes = prepare_params(params)

    out = reward_decoder(feat, prepped, num_classes=num_classes)
    out = jax.block_until_ready(out)

    ref = reward_decoder_ref(feat, params)
    assert out.shape == (B, T, C)
    assert bool(jnp.all(jnp.isfinite(out)))
    # both paths apply identical bf16 rounding; residual diff is accumulation
    # order only, so a 5e-3 tolerance is comfortable.
    assert jnp.allclose(out, ref, atol=5e-3, rtol=5e-3)

    print("KERNEL_OK")
</pallas_src>

<mosaic_0001>
module attributes {stable_mosaic.version = 11 : i64} {
  func.func @reward_decoder_kernel(%arg0: i32, %arg1: memref<8x32xf32, #tpu.memory_space<vmem>>, %arg2: memref<32x32xbf16, #tpu.memory_space<vmem>>, %arg3: memref<1x32xf32, #tpu.memory_space<vmem>>, %arg4: memref<1x32xf32, #tpu.memory_space<vmem>>, %arg5: memref<32x32xbf16, #tpu.memory_space<vmem>>, %arg6: memref<1x32xf32, #tpu.memory_space<vmem>>, %arg7: memref<1x32xf32, #tpu.memory_space<vmem>>, %arg8: memref<32x128xbf16, #tpu.memory_space<vmem>>, %arg9: memref<1x128xf32, #tpu.memory_space<vmem>>, %arg10: memref<8x128xf32, #tpu.memory_space<vmem>>) attributes {dimension_semantics = [#tpu.dimension_semantics<parallel>], iteration_bounds = array<i64: 2>, scalar_prefetch = 0 : i64, scratch_operands = 0 : i64, tpu.core_type = #tpu.core_type<tc>, window_params = [{transform_indices = @transform_0, window_bounds = array<i64: 8, 32>}, {pipeline_mode = #tpu.pipeline_mode<synchronous>, transform_indices = @transform_1, window_bounds = array<i64: 32, 32>}, {pipeline_mode = #tpu.pipeline_mode<synchronous>, transform_indices = @transform_2, window_bounds = array<i64: 1, 32>}, {pipeline_mode = #tpu.pipeline_mode<synchronous>, transform_indices = @transform_3, window_bounds = array<i64: 1, 32>}, {pipeline_mode = #tpu.pipeline_mode<synchronous>, transform_indices = @transform_4, window_bounds = array<i64: 32, 32>}, {pipeline_mode = #tpu.pipeline_mode<synchronous>, transform_indices = @transform_5, window_bounds = array<i64: 1, 32>}, {pipeline_mode = #tpu.pipeline_mode<synchronous>, transform_indices = @transform_6, window_bounds = array<i64: 1, 32>}, {pipeline_mode = #tpu.pipeline_mode<synchronous>, transform_indices = @transform_7, window_bounds = array<i64: 32, 128>}, {pipeline_mode = #tpu.pipeline_mode<synchronous>, transform_indices = @transform_8, window_bounds = array<i64: 1, 128>}, {transform_indices = @transform_9, window_bounds = array<i64: 8, 128>}]} {
    %c0 = arith.constant 0 : index
    %c0_0 = arith.constant 0 : index
    %0 = vector.load %arg1[%c0, %c0_0] : memref<8x32xf32, #tpu.memory_space<vmem>>, vector<8x32xf32>
    %1 = arith.truncf %0 : vector<8x32xf32> to vector<8x32xbf16>
    %c0_1 = arith.constant 0 : index
    %c0_2 = arith.constant 0 : index
    %2 = vector.load %arg2[%c0_1, %c0_2] : memref<32x32xbf16, #tpu.memory_space<vmem>>, vector<32x32xbf16>
    %cst = arith.constant dense<0.000000e+00> : vector<8x32xf32>
    %3 = tpu.matmul %1, %2, %cst {dimension_numbers = #tpu.dot_dimension_numbers<[1], [0], [0], [1], [0, 0, 1, 1], [], []>} : vector<8x32xbf16>, vector<32x32xbf16>, vector<8x32xf32> -> vector<8x32xf32>
    %cst_3 = arith.constant dense<0.000000e+00> : vector<8xf32>
    %4 = vector.multi_reduction <add>, %3, %cst_3 [1] : vector<8x32xf32> to vector<8xf32>
    %5 = vector.shape_cast %4 : vector<8xf32> to vector<8x1xf32>
    %cst_4 = arith.constant 3.200000e+01 : f32
    %6 = vector.broadcast %cst_4 : f32 to vector<8x1xf32>
    %7 = arith.divf %5, %6 : vector<8x1xf32>
    %8 = vector.broadcast %7 : vector<8x1xf32> to vector<8x32xf32>
    %9 = arith.subf %3, %8 : vector<8x32xf32>
    %10 = arith.mulf %9, %9 : vector<8x32xf32>
    %cst_5 = arith.constant dense<0.000000e+00> : vector<8xf32>
    %11 = vector.multi_reduction <add>, %10, %cst_5 [1] : vector<8x32xf32> to vector<8xf32>
    %12 = vector.shape_cast %11 : vector<8xf32> to vector<8x1xf32>
    %cst_6 = arith.constant 3.200000e+01 : f32
    %13 = vector.broadcast %cst_6 : f32 to vector<8x1xf32>
    %14 = arith.divf %12, %13 : vector<8x1xf32>
    %cst_7 = arith.constant 9.99999974E-6 : f32
    %15 = vector.broadcast %cst_7 : f32 to vector<8x1xf32>
    %16 = arith.addf %14, %15 : vector<8x1xf32>
    %17 = math.rsqrt %16 : vector<8x1xf32>
    %18 = vector.broadcast %17 : vector<8x1xf32> to vector<8x32xf32>
    %19 = arith.mulf %9, %18 : vector<8x32xf32>
    %c0_8 = arith.constant 0 : index
    %c0_9 = arith.constant 0 : index
    %20 = vector.load %arg3[%c0_8, %c0_9] : memref<1x32xf32, #tpu.memory_space<vmem>>, vector<1x32xf32>
    %21 = vector.broadcast %20 : vector<1x32xf32> to vector<8x32xf32>
    %22 = arith.mulf %19, %21 : vector<8x32xf32>
    %c0_10 = arith.constant 0 : index
    %c0_11 = arith.constant 0 : index
    %23 = vector.load %arg4[%c0_10, %c0_11] : memref<1x32xf32, #tpu.memory_space<vmem>>, vector<1x32xf32>
    %24 = vector.broadcast %23 : vector<1x32xf32> to vector<8x32xf32>
    %25 = arith.addf %22, %24 : vector<8x32xf32>
    %cst_12 = arith.constant 0.000000e+00 : f32
    %26 = vector.broadcast %cst_12 : f32 to vector<8x32xf32>
    %27 = arith.maximumf %25, %26 : vector<8x32xf32>
    %28 = arith.truncf %27 : vector<8x32xf32> to vector<8x32xbf16>
    %c0_13 = arith.constant 0 : index
    %c0_14 = arith.constant 0 : index
    %29 = vector.load %arg5[%c0_13, %c0_14] : memref<32x32xbf16, #tpu.memory_space<vmem>>, vector<32x32xbf16>
    %cst_15 = arith.constant dense<0.000000e+00> : vector<8x32xf32>
    %30 = tpu.matmul %28, %29, %cst_15 {dimension_numbers = #tpu.dot_dimension_numbers<[1], [0], [0], [1], [0, 0, 1, 1], [], []>} : vector<8x32xbf16>, vector<32x32xbf16>, vector<8x32xf32> -> vector<8x32xf32>
    %cst_16 = arith.constant dense<0.000000e+00> : vector<8xf32>
    %31 = vector.multi_reduction <add>, %30, %cst_16 [1] : vector<8x32xf32> to vector<8xf32>
    %32 = vector.shape_cast %31 : vector<8xf32> to vector<8x1xf32>
    %cst_17 = arith.constant 3.200000e+01 : f32
    %33 = vector.broadcast %cst_17 : f32 to vector<8x1xf32>
    %34 = arith.divf %32, %33 : vector<8x1xf32>
    %35 = vector.broadcast %34 : vector<8x1xf32> to vector<8x32xf32>
    %36 = arith.subf %30, %35 : vector<8x32xf32>
    %37 = arith.mulf %36, %36 : vector<8x32xf32>
    %cst_18 = arith.constant dense<0.000000e+00> : vector<8xf32>
    %38 = vector.multi_reduction <add>, %37, %cst_18 [1] : vector<8x32xf32> to vector<8xf32>
    %39 = vector.shape_cast %38 : vector<8xf32> to vector<8x1xf32>
    %cst_19 = arith.constant 3.200000e+01 : f32
    %40 = vector.broadcast %cst_19 : f32 to vector<8x1xf32>
    %41 = arith.divf %39, %40 : vector<8x1xf32>
    %cst_20 = arith.constant 9.99999974E-6 : f32
    %42 = vector.broadcast %cst_20 : f32 to vector<8x1xf32>
    %43 = arith.addf %41, %42 : vector<8x1xf32>
    %44 = math.rsqrt %43 : vector<8x1xf32>
    %45 = vector.broadcast %44 : vector<8x1xf32> to vector<8x32xf32>
    %46 = arith.mulf %36, %45 : vector<8x32xf32>
    %c0_21 = arith.constant 0 : index
    %c0_22 = arith.constant 0 : index
    %47 = vector.load %arg6[%c0_21, %c0_22] : memref<1x32xf32, #tpu.memory_space<vmem>>, vector<1x32xf32>
    %48 = vector.broadcast %47 : vector<1x32xf32> to vector<8x32xf32>
    %49 = arith.mulf %46, %48 : vector<8x32xf32>
    %c0_23 = arith.constant 0 : index
    %c0_24 = arith.constant 0 : index
    %50 = vector.load %arg7[%c0_23, %c0_24] : memref<1x32xf32, #tpu.memory_space<vmem>>, vector<1x32xf32>
    %51 = vector.broadcast %50 : vector<1x32xf32> to vector<8x32xf32>
    %52 = arith.addf %49, %51 : vector<8x32xf32>
    %cst_25 = arith.constant 0.000000e+00 : f32
    %53 = vector.broadcast %cst_25 : f32 to vector<8x32xf32>
    %54 = arith.maximumf %52, %53 : vector<8x32xf32>
    %55 = arith.truncf %54 : vector<8x32xf32> to vector<8x32xbf16>
    %c0_26 = arith.constant 0 : index
    %c0_27 = arith.constant 0 : index
    %56 = vector.load %arg8[%c0_26, %c0_27] : memref<32x128xbf16, #tpu.memory_space<vmem>>, vector<32x128xbf16>
    %cst_28 = arith.constant dense<0.000000e+00> : vector<8x128xf32>
    %57 = tpu.matmul %55, %56, %cst_28 {dimension_numbers = #tpu.dot_dimension_numbers<[1], [0], [0], [1], [0, 0, 1, 1], [], []>} : vector<8x32xbf16>, vector<32x128xbf16>, vector<8x128xf32> -> vector<8x128xf32>
    %c0_29 = arith.constant 0 : index
    %c0_30 = arith.constant 0 : index
    %58 = vector.load %arg9[%c0_29, %c0_30] : memref<1x128xf32, #tpu.memory_space<vmem>>, vector<1x128xf32>
    %59 = vector.broadcast %58 : vector<1x128xf32> to vector<8x128xf32>
    %60 = arith.addf %57, %59 : vector<8x128xf32>
    %c0_31 = arith.constant 0 : index
    %c0_32 = arith.constant 0 : index
    %61 = vector.load %arg10[%c0_31, %c0_32] : memref<8x128xf32, #tpu.memory_space<vmem>>, vector<8x128xf32>
    tpu.vector_store %arg10[%c0_31, %c0_32], %60 {strides = array<i32>} : memref<8x128xf32, #tpu.memory_space<vmem>>, vector<8x128xf32>,
    return
  }
  func.func @transform_0(%arg0: i32) -> (i32, i32) {
    %c0_i32 = arith.constant 0 : i32
    %c0_i32_0 = arith.constant 0 : i32
    return %arg0, %c0_i32 : i32, i32
  }
  func.func @transform_1(%arg0: i32) -> (i32, i32) {
    %c0_i32 = arith.constant 0 : i32
    %c0_i32_0 = arith.constant 0 : i32
    %c0_i32_1 = arith.constant 0 : i32
    return %c0_i32, %c0_i32_0 : i32, i32
  }
  func.func @transform_2(%arg0: i32) -> (i32, i32) {
    %c0_i32 = arith.constant 0 : i32
    %c0_i32_0 = arith.constant 0 : i32
    %c0_i32_1 = arith.constant 0 : i32
    return %c0_i32, %c0_i32_0 : i32, i32
  }
  func.func @transform_3(%arg0: i32) -> (i32, i32) {
    %c0_i32 = arith.constant 0 : i32
    %c0_i32_0 = arith.constant 0 : i32
    %c0_i32_1 = arith.constant 0 : i32
    return %c0_i32, %c0_i32_0 : i32, i32
  }
  func.func @transform_4(%arg0: i32) -> (i32, i32) {
    %c0_i32 = arith.constant 0 : i32
    %c0_i32_0 = arith.constant 0 : i32
    %c0_i32_1 = arith.constant 0 : i32
    return %c0_i32, %c0_i32_0 : i32, i32
  }
  func.func @transform_5(%arg0: i32) -> (i32, i32) {
    %c0_i32 = arith.constant 0 : i32
    %c0_i32_0 = arith.constant 0 : i32
    %c0_i32_1 = arith.constant 0 : i32
    return %c0_i32, %c0_i32_0 : i32, i32
  }
  func.func @transform_6(%arg0: i32) -> (i32, i32) {
    %c0_i32 = arith.constant 0 : i32
    %c0_i32_0 = arith.constant 0 : i32
    %c0_i32_1 = arith.constant 0 : i32
    return %c0_i32, %c0_i32_0 : i32, i32
  }
  func.func @transform_7(%arg0: i32) -> (i32, i32) {
    %c0_i32 = arith.constant 0 : i32
    %c0_i32_0 = arith.constant 0 : i32
    %c0_i32_1 = arith.constant 0 : i32
    return %c0_i32, %c0_i32_0 : i32, i32
  }
  func.func @transform_8(%arg0: i32) -> (i32, i32) {
    %c0_i32 = arith.constant 0 : i32
    %c0_i32_0 = arith.constant 0 : i32
    %c0_i32_1 = arith.constant 0 : i32
    return %c0_i32, %c0_i32_0 : i32, i32
  }
  func.func @transform_9(%arg0: i32) -> (i32, i32) {
    %c0_i32 = arith.constant 0 : i32
    %c0_i32_0 = arith.constant 0 : i32
    return %arg0, %c0_i32 : i32, i32
  }
}

</mosaic_0001>

<llo_original>
// kernel: reward_decoder.1
$region0: #{reward_decoder.1}
  #allocation0 [shape = 'u32[]', space=smem, size = 0x4, offset = 0x4, fixed_abs, tag = 'smem constant byte address 0x4 - core index']
  #allocation1 [shape = 'u32[144,128]{1,0:T(1,128)}', space=vmem, size = 0x12000, scoped, tag = 'internal scratch']
  %s0 = inlined_call_operand.hbm [shape: f32[16,32], index: 0, kind: input, shape index: {}]
  %s1 = inlined_call_operand.vmem [shape: bf16[32,32], index: 1, kind: input, shape index: {}]
  %s2 = inlined_call_operand.vmem [shape: f32[1,32], index: 2, kind: input, shape index: {}]
  %s3 = inlined_call_operand.vmem [shape: f32[1,32], index: 3, kind: input, shape index: {}]
  %s4 = inlined_call_operand.hbm [shape: bf16[32,32], index: 4, kind: input, shape index: {}]
  %s5 = inlined_call_operand.hbm [shape: f32[1,32], index: 5, kind: input, shape index: {}]
  %s6 = inlined_call_operand.hbm [shape: f32[1,32], index: 6, kind: input, shape index: {}]
  %s7 = inlined_call_operand.vmem [shape: bf16[32,128], index: 7, kind: input, shape index: {}]
  %s8 = inlined_call_operand.hbm [shape: f32[1,128], index: 8, kind: input, shape index: {}]
  %s9 = inlined_call_operand.vmem [shape: f32[16,128], index: 9, kind: output, shape index: {}]
  %s10 = sld [smem:[#allocation0]]
  $region89: #{reward_decoder.1} parent=0
    _
  %s12 = ssub.s32 1, %s10
  %s13 = scalar_select 0, %s12, %s10
  $region1: #{reward_decoder.1} parent=0
    #allocation2 [shape = 'u8[8192]{0}', space=vmem, size = 0x2000, scoped, tag = 'input window, operand 0']
    #allocation3 [shape = 's32[2]{0}', space=sflag, size = 0x8, scoped, tag = 'scoped memory for reward_decoder.1']
    #allocation4 [shape = 'u8[8192]{0}', space=vmem, size = 0x2000, scoped, tag = 'input window, operand 4, single buffered']
    #allocation5 [shape = 's32[1]{0}', space=sflag, size = 0x4, scoped, tag = 'scoped memory for reward_decoder.1']
    #allocation6 [shape = 'u8[512]{0}', space=vmem, size = 0x400, scoped, tag = 'input window, operand 5, single buffered']
    #allocation7 [shape = 'u8[512]{0}', space=vmem, size = 0x400, scoped, tag = 'input window, operand 6, single buffered']
    #allocation8 [shape = 's32[1]{0}', space=sflag, size = 0x4, scoped, tag = 'scoped memory for reward_decoder.1']
    #allocation9 [shape = 'u8[512]{0}', space=vmem, size = 0x400, scoped, tag = 'input window, operand 8, single buffered']
    %14 = vsyncpa [#allocation3], 0
    %s15 = scalar_lea.sflag [#allocation3], 1
    %16 = vsyncpa %s15, 0
    %17 = vsyncpa [#allocation5], 0
    %18 = vsyncpa [#allocation8], 0
    loop: start=0, step=1, limit=4
    $region2: #{reward_decoder.1} parent=1 // loop_pre_header
      _
    $region3: #{reward_decoder.1} parent=1 // loop_header
      %s20 = sphi 0, %s24
      %p21 = scmp.ge.s32.totalorder %s20, 4
      %s30 = sphi 0, %s32
      %s33 = sphi 0, %s30
      %s34 = sphi 0, %s33
      %s50 = sphi 0, %s34
      %s54 = sphi 0, %s54
      %s56 = sphi 0, %s54
      %s57 = sphi 0, %s56
      %s71 = sphi 0, %s57
      %s75 = sphi 0, %s75
      %s77 = sphi 0, %s75
      %s78 = sphi 0, %s77
      %s92 = sphi 0, %s78
      %s96 = sphi 0, %s96
      %s98 = sphi 0, %s96
      %s99 = sphi 0, %s98
      %s113 = sphi 0, %s99
      %s117 = sphi 0, %s117
      %s119 = sphi 0, %s117
      %s120 = sphi 0, %s119
      %s134 = sphi 0, %s120
      %s138 = sphi 0, %s138
      %s140 = sphi 0, %s138
      %s141 = sphi 0, %s140
      %s155 = sphi 0, %s141
      %s159 = sphi 0, %s159
      %s161 = sphi 0, %s159
      %s162 = sphi 0, %s161
      %s176 = sphi 0, %s162
      %s180 = sphi 0, %s180
      %s182 = sphi 0, %s180
      %s183 = sphi 0, %s182
      %s197 = sphi 0, %s183
      %s201 = sphi 0, %s201
      %s203 = sphi 0, %s201
      %s204 = sphi 0, %s203
      %s218 = sphi 0, %s204
      %s224 = sphi 0, %s226
      %s227 = sphi 0, %s224
      %s228 = sphi 0, %s227
      %s244 = sphi 0, %s228
    $region4: #{reward_decoder.1} parent=1 // loop_header_branch
      %23 = sbr.rel (%p21) target = $region8
    $region5: #{reward_decoder.1} parent=1 // loop_body
      %s25 = ssub.s32 %s20, 1
      %s26 = ssub.s32 %s20, 2
      %s27 = sadd.s32 %s20, 1
      %s28 = ssub.s32 %s20, %s27
      %p29 = scmp.eq.s32.totalorder %s28, 0
      %s31 = sadd.s32 %s30, 1
      %s32 = scalar_select %p29, %s30, %s31
      %p35 = pneg %p29
      %p36 = scmp.eq.s32.totalorder %s20, 1
      %p37 = por %p35, %p36
      %p38 = scmp.ne.s32.totalorder %s30, %s33
      %p39 = scmp.eq.s32.totalorder %s20, 0
      %p40 = por %p38, %p39
      %p41 = scmp.ne.s32.totalorder %s30, %s33
      %p42 = scmp.eq.s32.totalorder %s25, 1
      %p43 = por %p41, %p42
      %p44 = scmp.ne.s32.totalorder %s33, %s34
      %p45 = scmp.eq.s32.totalorder %s25, 0
      %p46 = por %p44, %p45
      %p47 = scmp.ne.s32.totalorder %s33, %s34
      %p48 = scmp.eq.s32.totalorder %s26, 1
      %p49 = por %p47, %p48
      %p51 = scmp.ne.s32.totalorder %s34, %s50
      %p52 = scmp.eq.s32.totalorder %s26, 0
      %p53 = por %p51, %p52
      %s55 = sadd.s32 %s54, 1
      %p58 = scmp.eq.s32.totalorder %s20, 1
      %p59 = scmp.ne.s32.totalorder %s54, %s56
      %p60 = scmp.eq.s32.totalorder %s20, 0
      %p61 = por %p59, %p60
      %p62 = scmp.ne.s32.totalorder %s54, %s56
      %p63 = scmp.eq.s32.totalorder %s25, 1
      %p64 = por %p62, %p63
      %p65 = scmp.ne.s32.totalorder %s56, %s57
      %p66 = scmp.eq.s32.totalorder %s25, 0
      %p67 = por %p65, %p66
      %p68 = scmp.ne.s32.totalorder %s56, %s57
      %p69 = scmp.eq.s32.totalorder %s26, 1
      %p70 = por %p68, %p69
      %p72 = scmp.ne.s32.totalorder %s57, %s71
      %p73 = scmp.eq.s32.totalorder %s26, 0
      %p74 = por %p72, %p73
      %s76 = sadd.s32 %s75, 1
      %p79 = scmp.eq.s32.totalorder %s20, 1
      %p80 = scmp.ne.s32.totalorder %s75, %s77
      %p81 = scmp.eq.s32.totalorder %s20, 0
      %p82 = por %p80, %p81
      %p83 = scmp.ne.s32.totalorder %s75, %s77
      %p84 = scmp.eq.s32.totalorder %s25, 1
      %p85 = por %p83, %p84
      %p86 = scmp.ne.s32.totalorder %s77, %s78
      %p87 = scmp.eq.s32.totalorder %s25, 0
      %p88 = por %p86, %p87
      %p89 = scmp.ne.s32.totalorder %s77, %s78
      %p90 = scmp.eq.s32.totalorder %s26, 1
      %p91 = por %p89, %p90
      %p93 = scmp.ne.s32.totalorder %s78, %s92
      %p94 = scmp.eq.s32.totalorder %s26, 0
      %p95 = por %p93, %p94
      %s97 = sadd.s32 %s96, 1
      %p100 = scmp.eq.s32.totalorder %s20, 1
      %p101 = scmp.ne.s32.totalorder %s96, %s98
      %p102 = scmp.eq.s32.totalorder %s20, 0
      %p103 = por %p101, %p102
      %p104 = scmp.ne.s32.totalorder %s96, %s98
      %p105 = scmp.eq.s32.totalorder %s25, 1
      %p106 = por %p104, %p105
      %p107 = scmp.ne.s32.totalorder %s98, %s99
      %p108 = scmp.eq.s32.totalorder %s25, 0
      %p109 = por %p107, %p108
      %p110 = scmp.ne.s32.totalorder %s98, %s99
      %p111 = scmp.eq.s32.totalorder %s26, 1
      %p112 = por %p110, %p111
      %p114 = scmp.ne.s32.totalorder %s99, %s113
      %p115 = scmp.eq.s32.totalorder %s26, 0
      %p116 = por %p114, %p115
      %s118 = sadd.s32 %s117, 1
      %p121 = scmp.eq.s32.totalorder %s20, 1
      %p122 = scmp.ne.s32.totalorder %s117, %s119
      %p123 = scmp.eq.s32.totalorder %s20, 0
      %p124 = por %p122, %p123
      %p125 = scmp.ne.s32.totalorder %s117, %s119
      %p126 = scmp.eq.s32.totalorder %s25, 1
      %p127 = por %p125, %p126
      %p128 = scmp.ne.s32.totalorder %s119, %s120
      %p129 = scmp.eq.s32.totalorder %s25, 0
      %p130 = por %p128, %p129
      %p131 = scmp.ne.s32.totalorder %s119, %s120
      %p132 = scmp.eq.s32.totalorder %s26, 1
      %p133 = por %p131, %p132
      %p135 = scmp.ne.s32.totalorder %s120, %s134
      %p136 = scmp.eq.s32.totalorder %s26, 0
      %p137 = por %p135, %p136
      %s139 = sadd.s32 %s138, 1
      %p142 = scmp.eq.s32.totalorder %s20, 1
      %p143 = scmp.ne.s32.totalorder %s138, %s140
      %p144 = scmp.eq.s32.totalorder %s20, 0
      %p145 = por %p143, %p144
      %p146 = scmp.ne.s32.totalorder %s138, %s140
      %p147 = scmp.eq.s32.totalorder %s25, 1
      %p148 = por %p146, %p147
      %p149 = scmp.ne.s32.totalorder %s140, %s141
      %p150 = scmp.eq.s32.totalorder %s25, 0
      %p151 = por %p149, %p150
      %p152 = scmp.ne.s32.totalorder %s140, %s141
      %p153 = scmp.eq.s32.totalorder %s26, 1
      %p154 = por %p152, %p153
      %p156 = scmp.ne.s32.totalorder %s141, %s155
      %p157 = scmp.eq.s32.totalorder %s26, 0
      %p158 = por %p156, %p157
      %s160 = sadd.s32 %s159, 1
      %p163 = scmp.eq.s32.totalorder %s20, 1
      %p164 = scmp.ne.s32.totalorder %s159, %s161
      %p165 = scmp.eq.s32.totalorder %s20, 0
      %p166 = por %p164, %p165
      %p167 = scmp.ne.s32.totalorder %s159, %s161
      %p168 = scmp.eq.s32.totalorder %s25, 1
      %p169 = por %p167, %p168
      %p170 = scmp.ne.s32.totalorder %s161, %s162
      %p171 = scmp.eq.s32.totalorder %s25, 0
      %p172 = por %p170, %p171
      %p173 = scmp.ne.s32.totalorder %s161, %s162
      %p174 = scmp.eq.s32.totalorder %s26, 1
      %p175 = por %p173, %p174
      %p177 = scmp.ne.s32.totalorder %s162, %s176
      %p178 = scmp.eq.s32.totalorder %s26, 0
      %p179 = por %p177, %p178
      %s181 = sadd.s32 %s180, 1
      %p184 = scmp.eq.s32.totalorder %s20, 1
      %p185 = scmp.ne.s32.totalorder %s180, %s182
      %p186 = scmp.eq.s32.totalorder %s20, 0
      %p187 = por %p185, %p186
      %p188 = scmp.ne.s32.totalorder %s180, %s182
      %p189 = scmp.eq.s32.totalorder %s25, 1
      %p190 = por %p188, %p189
      %p191 = scmp.ne.s32.totalorder %s182, %s183
      %p192 = scmp.eq.s32.totalorder %s25, 0
      %p193 = por %p191, %p192
      %p194 = scmp.ne.s32.totalorder %s182, %s183
      %p195 = scmp.eq.s32.totalorder %s26, 1
      %p196 = por %p194, %p195
      %p198 = scmp.ne.s32.totalorder %s183, %s197
      %p199 = scmp.eq.s32.totalorder %s26, 0
      %p200 = por %p198, %p199
      %s202 = sadd.s32 %s201, 1
      %p205 = scmp.eq.s32.totalorder %s20, 1
      %p206 = scmp.ne.s32.totalorder %s201, %s203
      %p207 = scmp.eq.s32.totalorder %s20, 0
      %p208 = por %p206, %p207
      %p209 = scmp.ne.s32.totalorder %s201, %s203
      %p210 = scmp.eq.s32.totalorder %s25, 1
      %p211 = por %p209, %p210
      %p212 = scmp.ne.s32.totalorder %s203, %s204
      %p213 = scmp.eq.s32.totalorder %s25, 0
      %p214 = por %p212, %p213
      %p215 = scmp.ne.s32.totalorder %s203, %s204
      %p216 = scmp.eq.s32.totalorder %s26, 1
      %p217 = por %p215, %p216
      %p219 = scmp.ne.s32.totalorder %s204, %s218
      %p220 = scmp.eq.s32.totalorder %s26, 0
      %p221 = por %p219, %p220
      %s222 = ssub.s32 %s20, %s27
      %p223 = scmp.eq.s32.totalorder %s222, 0
      %s225 = sadd.s32 %s224, 1
      %s226 = scalar_select %p223, %s224, %s225
      %p229 = pneg %p223
      %p230 = scmp.eq.s32.totalorder %s20, 1
      %p231 = por %p229, %p230
      %p232 = scmp.ne.s32.totalorder %s224, %s227
      %p233 = scmp.eq.s32.totalorder %s20, 0
      %p234 = por %p232, %p233
      %p235 = scmp.ne.s32.totalorder %s224, %s227
      %p236 = scmp.eq.s32.totalorder %s25, 1
      %p237 = por %p235, %p236
      %p238 = scmp.ne.s32.totalorder %s227, %s228
      %p239 = scmp.eq.s32.totalorder %s25, 0
      %p240 = por %p238, %p239
      %p241 = scmp.ne.s32.totalorder %s227, %s228
      %p242 = scmp.eq.s32.totalorder %s26, 1
      %p243 = por %p241, %p242
      %p245 = scmp.ne.s32.totalorder %s228, %s244
      %p246 = scmp.eq.s32.totalorder %s26, 0
      %p247 = por %p245, %p246
      %p248 = scmp.le.s32.totalorder 1, %s20
      %p249 = scmp.lt.s32.totalorder %s20, 3
      %p250 = pnand %p248, %p249
      %p251 = pneg %p250
      // Predicated region
      $region9: #{reward_decoder.1} parent=5 // pred_check
        _
      $region10: #{reward_decoder.1} parent=5 // pred_check_branch
        %253 = sbr.rel (%p250) target = $region12
      $region11: #{reward_decoder.1} parent=5 // pred_region
        %s254 = ssub.s32 %s20, 1
        // Predicated region
        $region13: #{reward_decoder.1} parent=11 // pred_check
          %p255 = pneg %p67
        $region14: #{reward_decoder.1} parent=11 // pred_check_branch
          %257 = sbr.rel (%p255) target = $region16
        $region15: #{reward_decoder.1} parent=11 // pred_region
          _
        $region16: #{reward_decoder.1} parent=11 // pred_fallthru
          _
        // Predicated region
        $region17: #{reward_decoder.1} parent=11 // pred_check
          %p258 = pneg %p88
        $region18: #{reward_decoder.1} parent=11 // pred_check_branch
          %260 = sbr.rel (%p258) target = $region20
        $region19: #{reward_decoder.1} parent=11 // pred_region
          _
        $region20: #{reward_decoder.1} parent=11 // pred_fallthru
          _
        // Predicated region
        $region21: #{reward_decoder.1} parent=11 // pred_check
          %p261 = pneg %p109
        $region22: #{reward_decoder.1} parent=11 // pred_check_branch
          %263 = sbr.rel (%p261) target = $region24
        $region23: #{reward_decoder.1} parent=11 // pred_region
          _
        $region24: #{reward_decoder.1} parent=11 // pred_fallthru
          _
        // Predicated region
        $region25: #{reward_decoder.1} parent=11 // pred_check
          %p264 = pneg %p130
        $region26: #{reward_decoder.1} parent=11 // pred_check_branch
          %266 = sbr.rel (%p264) target = $region28
        $region27: #{reward_decoder.1} parent=11 // pred_region
          %s268 = ssub.s32 256, 256
          %269 = vsyncadd [#allocation5], %s268
          %s270 = sshll.u32 [#allocation4], 4
          %s271 = int_to_ptr.vmem [resolvable:$true] %s270
          %276 = dma.hbm_to_vmem [thread:$0]  %s4, 256, %s271, [#allocation5], 64, 64, 4
        $region28: #{reward_decoder.1} parent=11 // pred_fallthru
          _
        // Predicated region
        $region29: #{reward_decoder.1} parent=11 // pred_check
          %p277 = pneg %p151
        $region30: #{reward_decoder.1} parent=11 // pred_check_branch
          %279 = sbr.rel (%p277) target = $region32
        $region31: #{reward_decoder.1} parent=11 // pred_region
          %s281 = ssub.s32 16, 16
          %282 = vsyncadd [#allocation5], %s281
          %s284 = sshll.u32 [#allocation6], 4
          %s285 = int_to_ptr.vmem [resolvable:$true] %s284
          %287 = dma.hbm_to_vmem [thread:$0]  %s5, 16, %s285, [#allocation5]
        $region32: #{reward_decoder.1} parent=11 // pred_fallthru
          _
        // Predicated region
        $region33: #{reward_decoder.1} parent=11 // pred_check
          %p288 = pneg %p172
        $region34: #{reward_decoder.1} parent=11 // pred_check_branch
          %290 = sbr.rel (%p288) target = $region36
        $region35: #{reward_decoder.1} parent=11 // pred_region
          %s292 = ssub.s32 16, 16
          %293 = vsyncadd [#allocation8], %s292
          %s295 = sshll.u32 [#allocation7], 4
          %s296 = int_to_ptr.vmem [resolvable:$true] %s295
          %298 = dma.hbm_to_vmem [thread:$0]  %s6, 16, %s296, [#allocation8]
        $region36: #{reward_decoder.1} parent=11 // pred_fallthru
          _
        // Predicated region
        $region37: #{reward_decoder.1} parent=11 // pred_check
          %p299 = pneg %p193
        $region38: #{reward_decoder.1} parent=11 // pred_check_branch
          %301 = sbr.rel (%p299) target = $region40
        $region39: #{reward_decoder.1} parent=11 // pred_region
          _
        $region40: #{reward_decoder.1} parent=11 // pred_fallthru
          _
        // Predicated region
        $region41: #{reward_decoder.1} parent=11 // pred_check
          %p302 = pneg %p214
        $region42: #{reward_decoder.1} parent=11 // pred_check_branch
          %304 = sbr.rel (%p302) target = $region44
        $region43: #{reward_decoder.1} parent=11 // pred_region
          %s306 = ssub.s32 16, 16
          %307 = vsyncadd [#allocation8], %s306
          %s309 = sshll.u32 [#allocation9], 4
          %s310 = int_to_ptr.vmem [resolvable:$true] %s309
          %312 = dma.hbm_to_vmem [thread:$0]  %s8, 16, %s310, [#allocation8]
        $region44: #{reward_decoder.1} parent=11 // pred_fallthru
          _
      $region12: #{reward_decoder.1} parent=5 // pred_fallthru
        _
      %p313 = scmp.lt.s32.totalorder %s20, 2
      // Predicated region
      $region45: #{reward_decoder.1} parent=5 // pred_check
        %p314 = pneg %p313
      $region46: #{reward_decoder.1} parent=5 // pred_check_branch
        %316 = sbr.rel (%p314) target = $region48
      $region47: #{reward_decoder.1} parent=5 // pred_region
        // Predicated region
        $region49: #{reward_decoder.1} parent=47 // pred_check
          %p317 = pneg %p40
        $region50: #{reward_decoder.1} parent=47 // pred_check_branch
          %319 = sbr.rel (%p317) target = $region52
        $region51: #{reward_decoder.1} parent=47 // pred_region
          %s320 = sand.u32 %s30, 1
          %s321 = scalar_lea.sflag [#allocation3], %s320
          %s322 = sand.u32 %s30, 1
          %s323 = smul.addr %s322, 8
          %s324 = scalar_lea.vmem [#allocation2], %s323
          %s326 = ssub.s32 128, 128
          %327 = vsyncadd %s321, %s326
          %s328 = smul.addr %s20, 128
          %s329 = scalar_lea.hbm %s0, %s328
          %s331 = sshll.u32 %s324, 4
          %s332 = int_to_ptr.vmem [resolvable:$true] %s331
          %334 = dma.hbm_to_vmem [thread:$0]  %s329, 128, %s332, %s321
        $region52: #{reward_decoder.1} parent=47 // pred_fallthru
          _
      $region48: #{reward_decoder.1} parent=5 // pred_fallthru
        _
      %p335 = scmp.le.s32.totalorder 1, %s20
      %p336 = scmp.lt.s32.totalorder %s20, 3
      %p337 = pnand %p335, %p336
      %p338 = pneg %p337
      // Predicated region
      $region53: #{reward_decoder.1} parent=5 // pred_check
        _
      $region54: #{reward_decoder.1} parent=5 // pred_check_branch
        %340 = sbr.rel (%p337) target = $region56
      $region55: #{reward_decoder.1} parent=5 // pred_region
        %s341 = ssub.s32 %s20, 1
        %s342 = sand.u32 %s33, 1
        %s343 = scalar_lea.sflag [#allocation3], %s342
        %s344 = sand.u32 %s33, 1
        %s345 = smul.addr %s344, 8
        %s346 = scalar_lea.vmem [#allocation2], %s345
        // Predicated region
        $region57: #{reward_decoder.1} parent=55 // pred_check
          %p347 = pneg %p46
        $region58: #{reward_decoder.1} parent=55 // pred_check_branch
          %349 = sbr.rel (%p347) target = $region60
        $region59: #{reward_decoder.1} parent=55 // pred_region
          %350 = dma.done %s343, 128
        $region60: #{reward_decoder.1} parent=55 // pred_fallthru
          _
        // Predicated region
        $region61: #{reward_decoder.1} parent=55 // pred_check
          %p351 = pneg %p130
        $region62: #{reward_decoder.1} parent=55 // pred_check_branch
          %353 = sbr.rel (%p351) target = $region64
        $region63: #{reward_decoder.1} parent=55 // pred_region
          %354 = dma.done [#allocation5], 256
        $region64: #{reward_decoder.1} parent=55 // pred_fallthru
          _
        // Predicated region
        $region65: #{reward_decoder.1} parent=55 // pred_check
          %p355 = pneg %p151
        $region66: #{reward_decoder.1} parent=55 // pred_check_branch
          %357 = sbr.rel (%p355) target = $region68
        $region67: #{reward_decoder.1} parent=55 // pred_region
          %358 = dma.done [#allocation5], 16
        $region68: #{reward_decoder.1} parent=55 // pred_fallthru
          _
        // Predicated region
        $region69: #{reward_decoder.1} parent=55 // pred_check
          %p359 = pneg %p172
        $region70: #{reward_decoder.1} parent=55 // pred_check_branch
          %361 = sbr.rel (%p359) target = $region72
        $region71: #{reward_decoder.1} parent=55 // pred_region
          %362 = dma.done [#allocation8], 16
        $region72: #{reward_decoder.1} parent=55 // pred_fallthru
          _
        // Predicated region
        $region73: #{reward_decoder.1} parent=55 // pred_check
          %p363 = pneg %p214
        $region74: #{reward_decoder.1} parent=55 // pred_check_branch
          %365 = sbr.rel (%p363) target = $region76
        $region75: #{reward_decoder.1} parent=55 // pred_region
          %366 = dma.done [#allocation8], 16
        $region76: #{reward_decoder.1} parent=55 // pred_fallthru
          _
        %s367 = sand.u32 %s33, 1
        %s368 = scalar_lea.sflag [#allocation3], %s367
        %s369 = sand.u32 %s33, 1
        %s370 = smul.addr %s369, 8
        %s371 = scalar_lea.vmem [#allocation2], %s370
        %p372 = pneg %p46
        %p373 = pneg %p43
        %p374 = pneg %p67
        %p375 = pneg %p64
        %p376 = pneg %p88
        %p377 = pneg %p85
        %p378 = pneg %p109
        %p379 = pneg %p106
        %p380 = pneg %p130
        %p381 = pneg %p127
        %p382 = pneg %p151
        %p383 = pneg %p148
        %p384 = pneg %p172
        %p385 = pneg %p169
        %p386 = pneg %p193
        %p387 = pneg %p190
        %p388 = pneg %p214
        %p389 = pneg %p211
        %p390 = pneg %p240
        %p391 = pneg %p237
        %p392 = scmp.lt.s32.totalorder %s25, 1
        %s393 = scalar_select %p392, %s25, 1
        %s394 = smul.addr %s393, 8
        %s395 = scalar_lea.vmem %s9, %s394
        %p396 = scmp.lt.s32.totalorder %s25, 1
        %s397 = scalar_select %p396, %s25, 1
        %s398 = smul.addr %s397, 8
        %s399 = scalar_lea.vmem %s9, %s398
        %v401 = vld [vmem:[%s346] sm:$0xff]
        %v402 = vpack.c.bf16 %v401, %v401
        %v403 = vld [vmem:[%s1] sm:$0xf]
        %v404 = vld [vmem:[%s1 + $0x4] sm:$0xf]
        %v405 = vld [vmem:[%s1 + $0x8] sm:$0xf]
        %v406 = vld [vmem:[%s1 + $0xc] sm:$0xf]
        %v411 = vunpack.c.l.b16 %v403
        %v412 = vunpack.c.l.b16 %v404
        %v413 = vunpack.c.l.b16 %v405
        %v414 = vunpack.c.l.b16 %v406
        %v415 = vpack.c.b16 %v412, %v411
        %v416 = vpack.c.b16 %v414, %v413
        %vm419 = vcmask 261120
        %v421 = vsel %vm419, %v402, 0
        %423 = vmatprep.subr.bf16.mxu0 0
        %424 = vmatpush1.bf16.msra.mxu0 %v415
        %425 = vmatprep.subr.bf16.mxu0 0
        %426 = vmatpush1.bf16.msra.mxu0 %v416
        %427 = vmatprep.subr.bf16.mxu0 0
        %428 = vmatpush1.bf16.msra.mxu0 0
        %429 = vmatprep.subr.bf16.mxu0 0
        %430 = vmatpush1.bf16.msra.mxu0 0
        %431 = vmatprep.subr.bf16.mxu0 0
        %432 = vmatpush1.bf16.msra.mxu0 0
        %433 = vmatprep.subr.bf16.mxu0 0
        %434 = vmatpush1.bf16.msra.mxu0 0
        %435 = vmatprep.subr.bf16.mxu0 0
        %436 = vmatpush1.bf16.msra.mxu0 0
        %437 = vmatprep.subr.bf16.mxu0 0
        %438 = vmatpush1.bf16.msra.mxu0 0
        %439 = vmatprep.subr.bf16.mxu0 0
        %440 = vmatpush1.bf16.msra.mxu0 0
        %441 = vmatprep.subr.bf16.mxu0 0
        %442 = vmatpush1.bf16.msra.mxu0 0
        %443 = vmatprep.subr.bf16.mxu0 0
        %444 = vmatpush1.bf16.msra.mxu0 0
        %445 = vmatprep.subr.bf16.mxu0 0
        %446 = vmatpush1.bf16.msra.mxu0 0
        %447 = vmatprep.subr.bf16.mxu0 0
        %448 = vmatpush1.bf16.msra.mxu0 0
        %449 = vmatprep.subr.bf16.mxu0 0
        %450 = vmatpush1.bf16.msra.mxu0 0
        %451 = vmatprep.subr.bf16.mxu0 0
        %452 = vmatpush1.bf16.msra.mxu0 0
        %453 = vmatprep.subr.bf16.mxu0 0
        %454 = vmatpush1.bf16.msra.mxu0 0
        %455 = vmatprep.mubr.bf16.mxu0 0
        %456 = vmatmul.mubr.bf16.gmra.mrb[0].mxu0 %v421
        %v457 = vpop.f32.mrb[0].mxu0
        %v458 = vadd.f32 0.0, %v457
        %v459 = vpop.f32.mrb[0].mxu0
        %v460 = vpop.f32.mrb[0].mxu0
        %v461 = vpop.f32.mrb[0].mxu0
        %462 = vdwg.mxu0
        %v463 = vsel %vm419, %v458, 0.0
        %464 = vadd.xlane.f32.xlu0 %v463
        %v465 = vpop.xlane.xlu0 %464
        %v466 = vrcp.pop 32.0
        %v467 = vmul.f32 %v465, %v466
        %v468 = vsub.f32 %v458, %v467
        %v469 = vmul.f32 %v468, %v468
        %v470 = vsel %vm419, %v469, 0.0
        %471 = vadd.xlane.f32.xlu0 %v470
        %v472 = vpop.xlane.xlu0 %471
        %v473 = vmul.f32 %v472, %v466
        %v474 = vadd.f32 %v473, 1e-05
        %v475 = vrsqrt.pop %v474
        %v476 = vmul.f32 %v468, %v475
        %v477 = vld [vmem:[%s2] sm:$0x1]
        %v479 = vlaneseq
        %v480 = vshrl.u32 %v479, 7
        %v481 = vsub.s32 0, %v480
        %v482 = vrot.slane %v477, %v481
        %v484 = vmul.f32 %v476, %v482
        %v485 = vld [vmem:[%s3] sm:$0x1]
        %v487 = vlaneseq
        %v488 = vshrl.u32 %v487, 7
        %v489 = vsub.s32 0, %v488
        %v490 = vrot.slane %v485, %v489
        %v492 = vadd.f32 %v484, %v490
        %v493 = vmax.f32 %v492, 0.0
        %v494 = vpack.c.bf16 %v493, %v493
        %v495 = vld [vmem:[#allocation4] sm:$0xf]
        %v496 = vld [vmem:[#allocation4 + $0x4] sm:$0xf]
        %v497 = vld [vmem:[#allocation4 + $0x8] sm:$0xf]
        %v498 = vld [vmem:[#allocation4 + $0xc] sm:$0xf]
        %v503 = vunpack.c.l.b16 %v495
        %v504 = vunpack.c.l.b16 %v496
        %v505 = vunpack.c.l.b16 %v497
        %v506 = vunpack.c.l.b16 %v498
        %v507 = vpack.c.b16 %v504, %v503
        %v508 = vpack.c.b16 %v506, %v505
        %v512 = vsel %vm419, %v494, 0
        %514 = vmatprep.subr.bf16.mxu0 0
        %515 = vmatpush1.bf16.msra.mxu0 %v507
        %516 = vmatprep.subr.bf16.mxu0 0
        %517 = vmatpush1.bf16.msra.mxu0 %v508
        %518 = vmatprep.subr.bf16.mxu0 0
        %519 = vmatpush1.bf16.msra.mxu0 0
        %520 = vmatprep.subr.bf16.mxu0 0
        %521 = vmatpush1.bf16.msra.mxu0 0
        %522 = vmatprep.subr.bf16.mxu0 0
        %523 = vmatpush1.bf16.msra.mxu0 0
        %524 = vmatprep.subr.bf16.mxu0 0
        %525 = vmatpush1.bf16.msra.mxu0 0
        %526 = vmatprep.subr.bf16.mxu0 0
        %527 = vmatpush1.bf16.msra.mxu0 0
        %528 = vmatprep.subr.bf16.mxu0 0
        %529 = vmatpush1.bf16.msra.mxu0 0
        %530 = vmatprep.subr.bf16.mxu0 0
        %531 = vmatpush1.bf16.msra.mxu0 0
        %532 = vmatprep.subr.bf16.mxu0 0
        %533 = vmatpush1.bf16.msra.mxu0 0
        %534 = vmatprep.subr.bf16.mxu0 0
        %535 = vmatpush1.bf16.msra.mxu0 0
        %536 = vmatprep.subr.bf16.mxu0 0
        %537 = vmatpush1.bf16.msra.mxu0 0
        %538 = vmatprep.subr.bf16.mxu0 0
        %539 = vmatpush1.bf16.msra.mxu0 0
        %540 = vmatprep.subr.bf16.mxu0 0
        %541 = vmatpush1.bf16.msra.mxu0 0
        %542 = vmatprep.subr.bf16.mxu0 0
        %543 = vmatpush1.bf16.msra.mxu0 0
        %544 = vmatprep.subr.bf16.mxu0 0
        %545 = vmatpush1.bf16.msra.mxu0 0
        %546 = vmatprep.mubr.bf16.mxu0 0
        %547 = vmatmul.mubr.bf16.gmra.mrb[0].mxu0 %v512
        %v548 = vpop.f32.mrb[0].mxu0
        %v549 = vadd.f32 0.0, %v548
        %v550 = vpop.f32.mrb[0].mxu0
        %v551 = vpop.f32.mrb[0].mxu0
        %v552 = vpop.f32.mrb[0].mxu0
        %553 = vdwg.mxu0
        %v554 = vsel %vm419, %v549, 0.0
        %555 = vadd.xlane.f32.xlu0 %v554
        %v556 = vpop.xlane.xlu0 %555
        %v557 = vmul.f32 %v556, %v466
        %v558 = vsub.f32 %v549, %v557
        %v559 = vmul.f32 %v558, %v558
        %v560 = vsel %vm419, %v559, 0.0
        %561 = vadd.xlane.f32.xlu0 %v560
        %v562 = vpop.xlane.xlu0 %561
        %v563 = vmul.f32 %v562, %v466
        %v564 = vadd.f32 %v563, 1e-05
        %v565 = vrsqrt.pop %v564
        %v566 = vmul.f32 %v558, %v565
        %v567 = vld [vmem:[#allocation6] sm:$0x1]
        %v569 = vlaneseq
        %v570 = vshrl.u32 %v569, 7
        %v571 = vsub.s32 0, %v570
        %v572 = vrot.slane %v567, %v571
        %v574 = vmul.f32 %v566, %v572
        %v575 = vld [vmem:[#allocation7] sm:$0x1]
        %v577 = vlaneseq
        %v578 = vshrl.u32 %v577, 7
        %v579 = vsub.s32 0, %v578
        %v580 = vrot.slane %v575, %v579
        %v582 = vadd.f32 %v574, %v580
        %v583 = vmax.f32 %v582, 0.0
        %v584 = vpack.c.bf16 %v583, %v583
        %v585 = vld [vmem:[%s7] sm:$0xf]
        %v586 = vld [vmem:[%s7 + $0x4] sm:$0xf]
        %v587 = vld [vmem:[%s7 + $0x8] sm:$0xf]
        %v588 = vld [vmem:[%s7 + $0xc] sm:$0xf]
        %v589 = vld [vmem:[#allocation9] sm:$0x1]
        %v591 = vlaneseq
        %v592 = vshrl.u32 %v591, 7
        %v593 = vsub.s32 0, %v592
        %v594 = vrot.slane %v589, %v593
        %v600 = vunpack.c.l.b16 %v585
        %v601 = vunpack.c.l.b16 %v586
        %v602 = vunpack.c.l.b16 %v587
        %v603 = vunpack.c.l.b16 %v588
        %v604 = vpack.c.b16 %v601, %v600
        %v605 = vpack.c.b16 %v603, %v602
        %v609 = vsel %vm419, %v584, 0
        %611 = vmatprep.subr.bf16.mxu0 0
        %612 = vmatpush1.bf16.msra.mxu0 %v604
        %613 = vmatprep.subr.bf16.mxu0 0
        %614 = vmatpush1.bf16.msra.mxu0 %v605
        %615 = vmatprep.subr.bf16.mxu0 0
        %616 = vmatpush1.bf16.msra.mxu0 0
        %617 = vmatprep.subr.bf16.mxu0 0
        %618 = vmatpush1.bf16.msra.mxu0 0
        %619 = vmatprep.subr.bf16.mxu0 0
        %620 = vmatpush1.bf16.msra.mxu0 0
        %621 = vmatprep.subr.bf16.mxu0 0
        %622 = vmatpush1.bf16.msra.mxu0 0
        %623 = vmatprep.subr.bf16.mxu0 0
        %624 = vmatpush1.bf16.msra.mxu0 0
        %625 = vmatprep.subr.bf16.mxu0 0
        %626 = vmatpush1.bf16.msra.mxu0 0
        %627 = vmatprep.subr.bf16.mxu0 0
        %628 = vmatpush1.bf16.msra.mxu0 0
        %629 = vmatprep.subr.bf16.mxu0 0
        %630 = vmatpush1.bf16.msra.mxu0 0
        %631 = vmatprep.subr.bf16.mxu0 0
        %632 = vmatpush1.bf16.msra.mxu0 0
        %633 = vmatprep.subr.bf16.mxu0 0
        %634 = vmatpush1.bf16.msra.mxu0 0
        %635 = vmatprep.subr.bf16.mxu0 0
        %636 = vmatpush1.bf16.msra.mxu0 0
        %637 = vmatprep.subr.bf16.mxu0 0
        %638 = vmatpush1.bf16.msra.mxu0 0
        %639 = vmatprep.subr.bf16.mxu0 0
        %640 = vmatpush1.bf16.msra.mxu0 0
        %641 = vmatprep.subr.bf16.mxu0 0
        %642 = vmatpush1.bf16.msra.mxu0 0
        %643 = vmatprep.mubr.bf16.mxu0 0
        %644 = vmatmul.mubr.bf16.gmra.mrb[0].mxu0 %v609
        %v645 = vpop.f32.mrb[0].mxu0
        %v646 = vadd.f32 %v594, %v645
        %v647 = vpop.f32.mrb[0].mxu0
        %v648 = vpop.f32.mrb[0].mxu0
        %v649 = vpop.f32.mrb[0].mxu0
        %650 = vdwg.mxu0
        %651 = vst [vmem:[%s399] sm:$0xff] %v646
        %p652 = scmp.lt.s32.totalorder %s25, 1
        %s653 = scalar_select %p652, %s25, 1
        %s654 = smul.addr %s653, 8
        %s655 = scalar_lea.vmem %s9, %s654
        // Predicated region
        $region77: #{reward_decoder.1} parent=55 // pred_check
          %p656 = pneg %p237
        $region78: #{reward_decoder.1} parent=55 // pred_check_branch
          %658 = sbr.rel (%p656) target = $region80
        $region79: #{reward_decoder.1} parent=55 // pred_region
          _
        $region80: #{reward_decoder.1} parent=55 // pred_fallthru
          _
      $region56: #{reward_decoder.1} parent=5 // pred_fallthru
        _
      %p659 = scmp.le.s32.totalorder 2, %s20
      // Predicated region
      $region81: #{reward_decoder.1} parent=5 // pred_check
        %p660 = pneg %p659
      $region82: #{reward_decoder.1} parent=5 // pred_check_branch
        %662 = sbr.rel (%p660) target = $region84
      $region83: #{reward_decoder.1} parent=5 // pred_region
        %s663 = ssub.s32 %s20, 2
        // Predicated region
        $region85: #{reward_decoder.1} parent=83 // pred_check
          %p664 = pneg %p243
        $region86: #{reward_decoder.1} parent=83 // pred_check_branch
          %666 = sbr.rel (%p664) target = $region88
        $region87: #{reward_decoder.1} parent=83 // pred_region
          %p667 = scmp.lt.s32.totalorder %s26, 1
          %s668 = scalar_select %p667, %s26, 1
          %s669 = smul.addr %s668, 8
          %s670 = scalar_lea.vmem %s9, %s669
        $region88: #{reward_decoder.1} parent=83 // pred_fallthru
          _
      $region84: #{reward_decoder.1} parent=5 // pred_fallthru
        _
    $region6: #{reward_decoder.1} parent=1 // loop_footer
      %s24 = sadd.s32 1, %s20
    $region7: #{reward_decoder.1} parent=1 // loop_footer_branch
      %19 = sbr.rel target = $region3
    $region8: #{reward_decoder.1} parent=1 // loop_exit
      _
    %671 = vsyncpa [#allocation3], 1
    %s672 = scalar_lea.sflag [#allocation3], 1
    %673 = vsyncpa %s672, 1
    %674 = vsyncpa [#allocation5], 1
    %675 = vsyncpa [#allocation8], 1

</llo_original>
